<compile_context>
chip_gen: v7x
topology: tpu7x:2x2x1
jax: 0.10.0
libtpu: 0.0.40
codegen_flags: <defaults>
</compile_context>

<pallas_src>
import functools

import jax
import jax.numpy as jnp
from jax.experimental import pallas as pl
from jax.experimental.pallas import tpu as pltpu


def _round_up(x, m):
    return (x + m - 1) // m * m


def _tcl_kernel(x_ref, w_ref, o_ref, xs_ref, *, K, C, pad, W, HW, HWo, HWo_p, NB):
    # x_ref : (NB, C, H*W)        NB batch elements, spatial flattened on lanes
    # w_ref : (C_out, R)          [tap0 | tap1 | ... | bias | zero-pad] columns
    # o_ref : (NB, C_out, HWo_p)  lane-padded output
    # xs_ref: (R, NB*HWo_p)       VMEM scratch = stacked shifted slices + ones row

    # Re-init scratch constants every step (parallel-axis / per-core scratch safe).
    xs_ref[...] = jnp.zeros_like(xs_ref)
    xs_ref[K * C:K * C + 1, :] = jnp.ones((1, xs_ref.shape[1]), xs_ref.dtype)

    # Stage the K shifted activation slices as K stacked sublane groups.
    # Tap k reads x_padded[:, k*W : k*W + HWo] where x_padded has pad*W zero
    # columns on each side; translated to unpadded coordinates below.
    for k in range(K):
        src_start = max(0, (k - pad) * W)
        src_end = min(HW, (k - pad) * W + HWo)
        vlen = src_end - src_start
        if vlen <= 0:
            continue
        dst_start = src_start - (k - pad) * W
        for n in range(NB):
            dst = n * HWo_p + dst_start
            xs_ref[k * C:(k + 1) * C, dst:dst + vlen] = (
                x_ref[n, :, src_start:src_start + vlen])

    # One fused MXU matmul: all K taps + bias, all NB batch segments.
    acc = jnp.dot(w_ref[...], xs_ref[...], preferred_element_type=jnp.float32)

    # Lane-dense per-batch stores (HWo_p is a multiple of 128).
    for n in range(NB):
        o_ref[n] = acc[:, n * HWo_p:(n + 1) * HWo_p].astype(o_ref.dtype)


def tcl_forward(x_nchw, weight, bias, conv_size):
    """x_nchw: (N, C, H, W); weight: (C, C, K, 1) [OIHW]; bias: (C,)."""
    N, C, H, W = x_nchw.shape
    K = conv_size
    pad = K // 2
    H_out = H + 2 * pad - K + 1
    HW = H * W
    HWo = H_out * W
    HWo_p = _round_up(HWo, 128)          # keep output stores unmasked / lane-dense

    # Grid: 2 parallel steps when the batch splits evenly (both v7x TCs busy),
    # otherwise a single fully-collapsed step (v5e/v6e single-TC).
    G = 2 if (N >= 2 and N % 2 == 0) else 1
    NB = N // G

    # Stacked weight (C_out, R): per-tap (C_out, C_in) blocks, then the bias
    # column, zero-padded up to a sublane multiple of 8.
    R = _round_up(K * C + 1, 8)
    w_taps = jnp.transpose(weight[:, :, :, 0], (0, 2, 1)).reshape(C, K * C)
    w_s = jnp.zeros((C, R), dtype=x_nchw.dtype)
    w_s = w_s.at[:, :K * C].set(w_taps.astype(x_nchw.dtype))
    w_s = w_s.at[:, K * C].set(bias.astype(x_nchw.dtype))

    x_flat = x_nchw.reshape(N, C, HW)    # free metadata reshape

    itemsize = jnp.dtype(x_nchw.dtype).itemsize
    cost = pl.CostEstimate(
        flops=2 * N * HWo_p * (K * C + 1) * C,
        transcendentals=0,
        bytes_accessed=(x_flat.size + N * C * HWo_p + w_s.size) * itemsize,
    )

    kernel = functools.partial(
        _tcl_kernel, K=K, C=C, pad=pad, W=W, HW=HW, HWo=HWo, HWo_p=HWo_p, NB=NB)

    out_flat = pl.pallas_call(
        kernel,
        out_shape=jax.ShapeDtypeStruct((N, C, HWo_p), x_nchw.dtype),
        grid=(G,),
        in_specs=[
            pl.BlockSpec((NB, C, HW), lambda g: (g, 0, 0)),
            pl.BlockSpec((C, R), lambda g: (0, 0)),
        ],
        out_specs=pl.BlockSpec((NB, C, HWo_p), lambda g: (g, 0, 0)),
        scratch_shapes=[pltpu.VMEM((R, NB * HWo_p), x_nchw.dtype)],
        compiler_params=pltpu.CompilerParams(
            dimension_semantics=("parallel",)),
        cost_estimate=cost,
    )(x_flat, w_s)

    if HWo_p != HWo:
        out_flat = out_flat[:, :, :HWo]
    return out_flat.reshape(N, C, H_out, W)  # free metadata reshape


def tcl_reference(x_nchw, weight, bias, conv_size):
    pad = conv_size // 2
    out = jax.lax.conv_general_dilated(
        x_nchw, weight,
        window_strides=(1, 1),
        padding=((pad, pad), (0, 0)),
        dimension_numbers=("NCHW", "OIHW", "NCHW"))
    return out + bias[None, :, None, None]


if __name__ == "__main__":
    key = jax.random.PRNGKey(0)
    kx, kw, kb = jax.random.split(key, 3)

    N, dim, H, W = 2, 4, 16, 16
    conv_size = 3

    x = jax.random.normal(kx, (N, dim, H, W), dtype=jnp.float32)

    # Deterministic parameter init matching the module's __init__:
    #   weight (dim, dim, conv_size, 1) kaiming_normal_ (fan_in mode),
    #   bias   (dim,) PyTorch default uniform(-1/sqrt(fan_in), +1/sqrt(fan_in)).
    fan_in = dim * conv_size * 1
    weight = jax.random.normal(kw, (dim, dim, conv_size, 1), dtype=jnp.float32) * (
        (2.0 / fan_in) ** 0.5)
    bound = 1.0 / (fan_in ** 0.5)
    bias = jax.random.uniform(kb, (dim,), dtype=jnp.float32,
                              minval=-bound, maxval=bound)

    out = tcl_forward(x, weight, bias, conv_size)
    out = jax.block_until_ready(out)

    ref = tcl_reference(x, weight, bias, conv_size)
    assert out.shape == ref.shape, (out.shape, ref.shape)
    assert jnp.allclose(out, ref, atol=1e-5, rtol=1e-5), "mismatch vs reference conv"

    print("KERNEL_OK")
</pallas_src>

<mosaic_0001>
module attributes {stable_mosaic.version = 11 : i64} {
  func.func @_tcl_kernel(%arg0: i32, %arg1: memref<1x4x256xf32, #tpu.memory_space<vmem>>, %arg2: memref<4x16xf32, #tpu.memory_space<vmem>>, %arg3: memref<1x4x256xf32, #tpu.memory_space<vmem>>, %arg4: memref<16x256xf32, #tpu.memory_space<vmem>>) attributes {dimension_semantics = [#tpu.dimension_semantics<parallel>], iteration_bounds = array<i64: 2>, scalar_prefetch = 0 : i64, scratch_operands = 1 : i64, tpu.core_type = #tpu.core_type<tc>, window_params = [{transform_indices = @transform_0, window_bounds = array<i64: 1, 4, 256>}, {pipeline_mode = #tpu.pipeline_mode<synchronous>, transform_indices = @transform_1, window_bounds = array<i64: 4, 16>}, {transform_indices = @transform_2, window_bounds = array<i64: 1, 4, 256>}]} {
    %cst = arith.constant 0.000000e+00 : f32
    %0 = vector.broadcast %cst : f32 to vector<16x256xf32>
    %c0 = arith.constant 0 : index
    %c0_0 = arith.constant 0 : index
    %1 = vector.load %arg4[%c0, %c0_0] : memref<16x256xf32, #tpu.memory_space<vmem>>, vector<16x256xf32>
    tpu.vector_store %arg4[%c0, %c0_0], %0 {strides = array<i32>} : memref<16x256xf32, #tpu.memory_space<vmem>>, vector<16x256xf32>,
    %cst_1 = arith.constant 1.000000e+00 : f32
    %2 = vector.broadcast %cst_1 : f32 to vector<1x256xf32>
    %c12 = arith.constant 12 : index
    %c0_2 = arith.constant 0 : index
    %3 = vector.load %arg4[%c12, %c0_2] : memref<16x256xf32, #tpu.memory_space<vmem>>, vector<1x256xf32>
    tpu.vector_store %arg4[%c12, %c0_2], %2 {strides = array<i32>} : memref<16x256xf32, #tpu.memory_space<vmem>>, vector<1x256xf32>,
    %c0_3 = arith.constant 0 : index
    %c0_4 = arith.constant 0 : index
    %c0_5 = arith.constant 0 : index
    %4 = vector.load %arg1[%c0_3, %c0_4, %c0_5] : memref<1x4x256xf32, #tpu.memory_space<vmem>>, vector<1x4x240xf32>
    %5 = vector.shape_cast %4 : vector<1x4x240xf32> to vector<4x240xf32>
    %c0_6 = arith.constant 0 : index
    %c16 = arith.constant 16 : index
    %6 = vector.load %arg4[%c0_6, %c16] : memref<16x256xf32, #tpu.memory_space<vmem>>, vector<4x240xf32>
    tpu.vector_store %arg4[%c0_6, %c16], %5 {strides = array<i32>} : memref<16x256xf32, #tpu.memory_space<vmem>>, vector<4x240xf32>,
    %c0_7 = arith.constant 0 : index
    %c0_8 = arith.constant 0 : index
    %c0_9 = arith.constant 0 : index
    %7 = vector.load %arg1[%c0_7, %c0_8, %c0_9] : memref<1x4x256xf32, #tpu.memory_space<vmem>>, vector<1x4x256xf32>
    %8 = vector.shape_cast %7 : vector<1x4x256xf32> to vector<4x256xf32>
    %c4 = arith.constant 4 : index
    %c0_10 = arith.constant 0 : index
    %9 = vector.load %arg4[%c4, %c0_10] : memref<16x256xf32, #tpu.memory_space<vmem>>, vector<4x256xf32>
    tpu.vector_store %arg4[%c4, %c0_10], %8 {strides = array<i32>} : memref<16x256xf32, #tpu.memory_space<vmem>>, vector<4x256xf32>,
    %c0_11 = arith.constant 0 : index
    %c0_12 = arith.constant 0 : index
    %c16_13 = arith.constant 16 : index
    %10 = vector.load %arg1[%c0_11, %c0_12, %c16_13] : memref<1x4x256xf32, #tpu.memory_space<vmem>>, vector<1x4x240xf32>
    %11 = vector.shape_cast %10 : vector<1x4x240xf32> to vector<4x240xf32>
    %c8 = arith.constant 8 : index
    %c0_14 = arith.constant 0 : index
    %12 = vector.load %arg4[%c8, %c0_14] : memref<16x256xf32, #tpu.memory_space<vmem>>, vector<4x240xf32>
    tpu.vector_store %arg4[%c8, %c0_14], %11 {strides = array<i32>} : memref<16x256xf32, #tpu.memory_space<vmem>>, vector<4x240xf32>,
    %c0_15 = arith.constant 0 : index
    %c0_16 = arith.constant 0 : index
    %13 = vector.load %arg2[%c0_15, %c0_16] : memref<4x16xf32, #tpu.memory_space<vmem>>, vector<4x16xf32>
    %c0_17 = arith.constant 0 : index
    %c0_18 = arith.constant 0 : index
    %14 = vector.load %arg4[%c0_17, %c0_18] : memref<16x256xf32, #tpu.memory_space<vmem>>, vector<16x256xf32>
    %cst_19 = arith.constant dense<0.000000e+00> : vector<4x256xf32>
    %15 = tpu.matmul %13, %14, %cst_19 {dimension_numbers = #tpu.dot_dimension_numbers<[1], [0], [0], [1], [0, 0, 1, 1], [], []>} : vector<4x16xf32>, vector<16x256xf32>, vector<4x256xf32> -> vector<4x256xf32>
    %c0_20 = arith.constant 0 : index
    %c0_21 = arith.constant 0 : index
    %c0_22 = arith.constant 0 : index
    %16 = vector.load %arg3[%c0_20, %c0_21, %c0_22] : memref<1x4x256xf32, #tpu.memory_space<vmem>>, vector<1x4x256xf32>
    %17 = vector.shape_cast %16 : vector<1x4x256xf32> to vector<4x256xf32>
    %18 = vector.shape_cast %15 : vector<4x256xf32> to vector<1x4x256xf32>
    tpu.vector_store %arg3[%c0_20, %c0_21, %c0_22], %18 {strides = array<i32>} : memref<1x4x256xf32, #tpu.memory_space<vmem>>, vector<1x4x256xf32>,
    return
  }
  func.func @transform_0(%arg0: i32) -> (i32, i32, i32) {
    %c0_i32 = arith.constant 0 : i32
    %c0_i32_0 = arith.constant 0 : i32
    %c0_i32_1 = arith.constant 0 : i32
    return %arg0, %c0_i32, %c0_i32_0 : i32, i32, i32
  }
  func.func @transform_1(%arg0: i32) -> (i32, i32) {
    %c0_i32 = arith.constant 0 : i32
    %c0_i32_0 = arith.constant 0 : i32
    %c0_i32_1 = arith.constant 0 : i32
    return %c0_i32, %c0_i32_0 : i32, i32
  }
  func.func @transform_2(%arg0: i32) -> (i32, i32, i32) {
    %c0_i32 = arith.constant 0 : i32
    %c0_i32_0 = arith.constant 0 : i32
    %c0_i32_1 = arith.constant 0 : i32
    return %arg0, %c0_i32, %c0_i32_0 : i32, i32, i32
  }
}

</mosaic_0001>

<llo_original>
// kernel: tpu_custom_call.1
$region0: #{tpu_custom_call.1}
  #allocation0 [shape = 'u32[]', space=smem, size = 0x4, offset = 0x4, fixed_abs, tag = 'smem constant byte address 0x4 - core index']
  #allocation1 [shape = 'u32[144,128]{1,0:T(1,128)}', space=vmem, size = 0x12000, scoped, tag = 'internal scratch']
  #allocation2 [shape = 'f32[16,256]{1,0:T(8,128)}', space=vmem, size = 0x4000, scoped, tag = 'scratch operand']
  %s0 = inlined_call_operand.hbm [shape: f32[2,4,256], index: 0, kind: input, shape index: {}]
  %s1 = inlined_call_operand.hbm [shape: f32[4,16], index: 1, kind: input, shape index: {}]
  %s2 = inlined_call_operand.hbm [shape: f32[2,4,256], index: 2, kind: output, shape index: {}]
  %s3 = sld [smem:[#allocation0]]
  $region49: #{tpu_custom_call.1} parent=0
    _
  %s5 = ssub.s32 1, %s3
  %s6 = scalar_select 0, %s5, %s3
  $region1: #{tpu_custom_call.1} parent=0
    #allocation3 [shape = 'u8[8192]{0}', space=vmem, size = 0x2000, scoped, tag = 'input window, operand 0']
    #allocation4 [shape = 's32[2]{0}', space=sflag, size = 0x8, scoped, tag = 'scoped memory for tpu_custom_call.1']
    #allocation5 [shape = 's32[2]{0}', space=sflag, size = 0x8, scoped, tag = 'scoped memory for tpu_custom_call.1']
    #allocation6 [shape = 'u8[2048]{0}', space=vmem, size = 0x800, scoped, tag = 'input window, operand 1, single buffered']
    #allocation7 [shape = 's32[1]{0}', space=sflag, size = 0x4, scoped, tag = 'scoped memory for tpu_custom_call.1']
    #allocation8 [shape = 'u8[8192]{0}', space=vmem, size = 0x2000, scoped, tag = 'output window, operand 0']
    %7 = vsyncpa [#allocation4], 0
    %s8 = scalar_lea.sflag [#allocation4], 1
    %9 = vsyncpa %s8, 0
    %10 = vsyncpa [#allocation7], 0
    %11 = vsyncpa [#allocation5], 0
    %s12 = scalar_lea.sflag [#allocation5], 1
    %13 = vsyncpa %s12, 0
    loop: start=0, step=1, limit=4
    $region2: #{tpu_custom_call.1} parent=1 // loop_pre_header
      _
    $region3: #{tpu_custom_call.1} parent=1 // loop_header
      %s15 = sphi 0, %s19
      %p16 = scmp.ge.s32.totalorder %s15, 4
      %s25 = sphi 0, %s27
      %s28 = sphi 0, %s25
      %s29 = sphi 0, %s28
      %s45 = sphi 0, %s29
      %s49 = sphi 0, %s49
      %s51 = sphi 0, %s49
      %s52 = sphi 0, %s51
      %s66 = sphi 0, %s52
      %s72 = sphi 0, %s74
      %s75 = sphi 0, %s72
      %s76 = sphi 0, %s75
      %s92 = sphi 0, %s76
    $region4: #{tpu_custom_call.1} parent=1 // loop_header_branch
      %18 = sbr.rel (%p16) target = $region8
    $region5: #{tpu_custom_call.1} parent=1 // loop_body
      %s20 = ssub.s32 %s15, 1
      %s21 = ssub.s32 %s15, 2
      %s22 = sadd.s32 %s15, 1
      %s23 = ssub.s32 %s15, %s22
      %p24 = scmp.eq.s32.totalorder %s23, 0
      %s26 = sadd.s32 %s25, 1
      %s27 = scalar_select %p24, %s25, %s26
      %p30 = pneg %p24
      %p31 = scmp.eq.s32.totalorder %s15, 1
      %p32 = por %p30, %p31
      %p33 = scmp.ne.s32.totalorder %s25, %s28
      %p34 = scmp.eq.s32.totalorder %s15, 0
      %p35 = por %p33, %p34
      %p36 = scmp.ne.s32.totalorder %s25, %s28
      %p37 = scmp.eq.s32.totalorder %s20, 1
      %p38 = por %p36, %p37
      %p39 = scmp.ne.s32.totalorder %s28, %s29
      %p40 = scmp.eq.s32.totalorder %s20, 0
      %p41 = por %p39, %p40
      %p42 = scmp.ne.s32.totalorder %s28, %s29
      %p43 = scmp.eq.s32.totalorder %s21, 1
      %p44 = por %p42, %p43
      %p46 = scmp.ne.s32.totalorder %s29, %s45
      %p47 = scmp.eq.s32.totalorder %s21, 0
      %p48 = por %p46, %p47
      %s50 = sadd.s32 %s49, 1
      %p53 = scmp.eq.s32.totalorder %s15, 1
      %p54 = scmp.ne.s32.totalorder %s49, %s51
      %p55 = scmp.eq.s32.totalorder %s15, 0
      %p56 = por %p54, %p55
      %p57 = scmp.ne.s32.totalorder %s49, %s51
      %p58 = scmp.eq.s32.totalorder %s20, 1
      %p59 = por %p57, %p58
      %p60 = scmp.ne.s32.totalorder %s51, %s52
      %p61 = scmp.eq.s32.totalorder %s20, 0
      %p62 = por %p60, %p61
      %p63 = scmp.ne.s32.totalorder %s51, %s52
      %p64 = scmp.eq.s32.totalorder %s21, 1
      %p65 = por %p63, %p64
      %p67 = scmp.ne.s32.totalorder %s52, %s66
      %p68 = scmp.eq.s32.totalorder %s21, 0
      %p69 = por %p67, %p68
      %s70 = ssub.s32 %s15, %s22
      %p71 = scmp.eq.s32.totalorder %s70, 0
      %s73 = sadd.s32 %s72, 1
      %s74 = scalar_select %p71, %s72, %s73
      %p77 = pneg %p71
      %p78 = scmp.eq.s32.totalorder %s15, 1
      %p79 = por %p77, %p78
      %p80 = scmp.ne.s32.totalorder %s72, %s75
      %p81 = scmp.eq.s32.totalorder %s15, 0
      %p82 = por %p80, %p81
      %p83 = scmp.ne.s32.totalorder %s72, %s75
      %p84 = scmp.eq.s32.totalorder %s20, 1
      %p85 = por %p83, %p84
      %p86 = scmp.ne.s32.totalorder %s75, %s76
      %p87 = scmp.eq.s32.totalorder %s20, 0
      %p88 = por %p86, %p87
      %p89 = scmp.ne.s32.totalorder %s75, %s76
      %p90 = scmp.eq.s32.totalorder %s21, 1
      %p91 = por %p89, %p90
      %p93 = scmp.ne.s32.totalorder %s76, %s92
      %p94 = scmp.eq.s32.totalorder %s21, 0
      %p95 = por %p93, %p94
      %p96 = scmp.le.s32.totalorder 1, %s15
      %p97 = scmp.lt.s32.totalorder %s15, 3
      %p98 = pnand %p96, %p97
      %p99 = pneg %p98
      // Predicated region
      $region9: #{tpu_custom_call.1} parent=5 // pred_check
        _
      $region10: #{tpu_custom_call.1} parent=5 // pred_check_branch
        %101 = sbr.rel (%p98) target = $region12
      $region11: #{tpu_custom_call.1} parent=5 // pred_region
        %s102 = ssub.s32 %s15, 1
        // Predicated region
        $region13: #{tpu_custom_call.1} parent=11 // pred_check
          %p103 = pneg %p62
        $region14: #{tpu_custom_call.1} parent=11 // pred_check_branch
          %105 = sbr.rel (%p103) target = $region16
        $region15: #{tpu_custom_call.1} parent=11 // pred_region
          %s107 = ssub.s32 64, 64
          %108 = vsyncadd [#allocation7], %s107
          %s110 = sshll.u32 [#allocation6], 4
          %s111 = int_to_ptr.vmem [resolvable:$true] %s110
          %113 = dma.hbm_to_vmem [thread:$0]  %s1, 64, %s111, [#allocation7]
        $region16: #{tpu_custom_call.1} parent=11 // pred_fallthru
          _
      $region12: #{tpu_custom_call.1} parent=5 // pred_fallthru
        _
      %p114 = scmp.lt.s32.totalorder %s15, 2
      // Predicated region
      $region17: #{tpu_custom_call.1} parent=5 // pred_check
        %p115 = pneg %p114
      $region18: #{tpu_custom_call.1} parent=5 // pred_check_branch
        %117 = sbr.rel (%p115) target = $region20
      $region19: #{tpu_custom_call.1} parent=5 // pred_region
        // Predicated region
        $region21: #{tpu_custom_call.1} parent=19 // pred_check
          %p118 = pneg %p35
        $region22: #{tpu_custom_call.1} parent=19 // pred_check_branch
          %120 = sbr.rel (%p118) target = $region24
        $region23: #{tpu_custom_call.1} parent=19 // pred_region
          %s121 = sand.u32 %s25, 1
          %s122 = scalar_lea.sflag [#allocation4], %s121
          %s123 = sand.u32 %s25, 1
          %s124 = smul.addr %s123, 8
          %s125 = scalar_lea.vmem [#allocation3], %s124
          %s127 = ssub.s32 128, 128
          %128 = vsyncadd %s122, %s127
          %s129 = smul.addr %s15, 2
          %s130 = smul.addr %s129, 64
          %s131 = scalar_lea.hbm %s0, %s130
          %s133 = sshll.u32 %s125, 4
          %s134 = int_to_ptr.vmem [resolvable:$true] %s133
          %136 = dma.hbm_to_vmem [thread:$0]  %s131, 128, %s134, %s122
        $region24: #{tpu_custom_call.1} parent=19 // pred_fallthru
          _
      $region20: #{tpu_custom_call.1} parent=5 // pred_fallthru
        _
      %p137 = scmp.le.s32.totalorder 1, %s15
      %p138 = scmp.lt.s32.totalorder %s15, 3
      %p139 = pnand %p137, %p138
      %p140 = pneg %p139
      // Predicated region
      $region25: #{tpu_custom_call.1} parent=5 // pred_check
        _
      $region26: #{tpu_custom_call.1} parent=5 // pred_check_branch
        %142 = sbr.rel (%p139) target = $region28
      $region27: #{tpu_custom_call.1} parent=5 // pred_region
        %s143 = ssub.s32 %s15, 1
        %s144 = sand.u32 %s28, 1
        %s145 = scalar_lea.sflag [#allocation4], %s144
        %s146 = sand.u32 %s28, 1
        %s147 = smul.addr %s146, 8
        %s148 = scalar_lea.vmem [#allocation3], %s147
        // Predicated region
        $region29: #{tpu_custom_call.1} parent=27 // pred_check
          %p149 = pneg %p41
        $region30: #{tpu_custom_call.1} parent=27 // pred_check_branch
          %151 = sbr.rel (%p149) target = $region32
        $region31: #{tpu_custom_call.1} parent=27 // pred_region
          %152 = dma.done %s145, 128
        $region32: #{tpu_custom_call.1} parent=27 // pred_fallthru
          _
        // Predicated region
        $region33: #{tpu_custom_call.1} parent=27 // pred_check
          %p153 = pneg %p62
        $region34: #{tpu_custom_call.1} parent=27 // pred_check_branch
          %155 = sbr.rel (%p153) target = $region36
        $region35: #{tpu_custom_call.1} parent=27 // pred_region
          %156 = dma.done [#allocation7], 64
        $region36: #{tpu_custom_call.1} parent=27 // pred_fallthru
          _
        %s157 = sand.u32 %s28, 1
        %s158 = scalar_lea.sflag [#allocation4], %s157
        %s159 = sand.u32 %s28, 1
        %s160 = smul.addr %s159, 8
        %s161 = scalar_lea.vmem [#allocation3], %s160
        %p162 = pneg %p41
        %p163 = pneg %p38
        %p164 = pneg %p62
        %p165 = pneg %p59
        %p166 = pneg %p88
        %p167 = pneg %p85
        %s168 = sand.u32 %s75, 1
        %s169 = scalar_lea.sflag [#allocation5], %s168
        %s170 = sand.u32 %s75, 1
        %s171 = smul.addr %s170, 8
        %s172 = scalar_lea.vmem [#allocation8], %s171
        %173 = vst [vmem:[#allocation2] sm:$0xff] 0.0
        %174 = vst [vmem:[#allocation2 + $0x8] sm:$0xff] 0.0
        %175 = vst [vmem:[#allocation2 + $0x10] sm:$0xff] 0.0
        %176 = vst [vmem:[#allocation2 + $0x18] sm:$0xff] 0.0
        %v177 = vlaneseq
        %vm178 = vcmp.ge.s32.totalorder %v177, 0
        %vm179 = vcmp.lt.s32.totalorder %v177, 256
        %vm180 = vmand %vm178, %vm179
        %s181 = scalar_lea.vmem [#allocation2], 20
        %182 = vst.msk [vmem:[%s181] ss:$8 sm:$0x3] %vm180, 1.0
        %183 = vst.msk [vmem:[%s181] ss:$8 sm:$0x0] %vm180, 1.0
        %v184 = vld [vmem:[%s148] sm:$0xff]
        %v186 = vcombine.high %v184, %v184
        %187 = vrot.lane.b32.xlu0 %v184, 16
        %v188 = vpop.permute.xlu0 %187
        %189 = vrot.lane.b32.xlu0 %v186, 16
        %v190 = vpop.permute.xlu0 %189
        %vm191 = vcmask 130048
        %v192 = vsel %vm191, %v188, %v190
        %vm195 = vcmask 1043584
        %196 = vst.msk [vmem:[#allocation2] sm:$0xf] %vm195, %v188
        %197 = vst [vmem:[#allocation2 + $0x8] sm:$0xf] %v192
        %v198 = vld [vmem:[%s148] sm:$0xff]
        %v200 = vcombine.low %v198, %v198
        %202 = vst [vmem:[#allocation2] sm:$0xf0] %v200
        %203 = vst [vmem:[#allocation2 + $0x8] sm:$0xf0] %v198
        %v204 = vld [vmem:[%s148] sm:$0xff]
        %v206 = vcombine.high %v204, %v204
        %207 = vrot.lane.b32.xlu0 %v204, 112
        %v208 = vpop.permute.xlu0 %207
        %209 = vrot.lane.b32.xlu0 %v206, 112
        %v210 = vpop.permute.xlu0 %209
        %vm211 = vcmask 916480
        %v212 = vsel %vm211, %v208, %v210
        %215 = vst [vmem:[#allocation2 + $0x10] sm:$0xf] %v212
        %vm216 = vcmask 912384
        %217 = vst.msk [vmem:[#allocation2 + $0x18] sm:$0xf] %vm216, %v210
        %v218 = vld [vmem:[#allocation6] sm:$0xf]
        %v219 = vld [vmem:[#allocation2] sm:$0xff]
        %v220 = vld [vmem:[#allocation2 + $0x8] sm:$0xff]
        %v221 = vld [vmem:[#allocation2 + $0x10] sm:$0xff]
        %v222 = vld [vmem:[#allocation2 + $0x18] sm:$0xff]
        %v224 = vsel %vm191, %v218, 0
        %226 = vmatprep.subr.mxu0 %v220
        %227 = vmatpush1.msra.mxu0 %v219
        %228 = vmatprep.subr.mxu0 %v222
        %229 = vmatpush1.msra.mxu0 %v221
        %230 = vmatprep.subr.mxu0 0.0
        %231 = vmatpush1.msra.mxu0 0.0
        %232 = vmatprep.subr.mxu0 0.0
        %233 = vmatpush1.msra.mxu0 0.0
        %234 = vmatprep.subr.mxu0 0.0
        %235 = vmatpush1.msra.mxu0 0.0
        %236 = vmatprep.subr.mxu0 0.0
        %237 = vmatpush1.msra.mxu0 0.0
        %238 = vmatprep.subr.mxu0 0.0
        %239 = vmatpush1.msra.mxu0 0.0
        %240 = vmatprep.subr.mxu0 0.0
        %241 = vmatpush1.msra.mxu0 0.0
        %242 = vmatprep.subr.mxu0 0.0
        %243 = vmatpush1.msra.mxu0 0.0
        %244 = vmatprep.subr.mxu0 0.0
        %245 = vmatpush1.msra.mxu0 0.0
        %246 = vmatprep.subr.mxu0 0.0
        %247 = vmatpush1.msra.mxu0 0.0
        %248 = vmatprep.subr.mxu0 0.0
        %249 = vmatpush1.msra.mxu0 0.0
        %250 = vmatprep.subr.mxu0 0.0
        %251 = vmatpush1.msra.mxu0 0.0
        %252 = vmatprep.subr.mxu0 0.0
        %253 = vmatpush1.msra.mxu0 0.0
        %254 = vmatprep.subr.mxu0 0.0
        %255 = vmatpush1.msra.mxu0 0.0
        %256 = vmatprep.subr.mxu0 0.0
        %257 = vmatpush1.msra.mxu0 0.0
        %258 = vmatprep.subr.mxu0 0.0
        %259 = vmatpush1.msra.mxu0 0.0
        %260 = vmatprep.subr.mxu0 0.0
        %261 = vmatpush1.msra.mxu0 0.0
        %262 = vmatprep.subr.mxu0 0.0
        %263 = vmatpush1.msra.mxu0 0.0
        %264 = vmatprep.subr.mxu0 0.0
        %265 = vmatpush1.msra.mxu0 0.0
        %266 = vmatprep.subr.mxu0 0.0
        %267 = vmatpush1.msra.mxu0 0.0
        %268 = vmatprep.subr.mxu0 0.0
        %269 = vmatpush1.msra.mxu0 0.0
        %270 = vmatprep.subr.mxu0 0.0
        %271 = vmatpush1.msra.mxu0 0.0
        %272 = vmatprep.subr.mxu0 0.0
        %273 = vmatpush1.msra.mxu0 0.0
        %274 = vmatprep.subr.mxu0 0.0
        %275 = vmatpush1.msra.mxu0 0.0
        %276 = vmatprep.subr.mxu0 0.0
        %277 = vmatpush1.msra.mxu0 0.0
        %278 = vmatprep.subr.mxu0 0.0
        %279 = vmatpush1.msra.mxu0 0.0
        %280 = vmatprep.subr.mxu0 0.0
        %281 = vmatpush1.msra.mxu0 0.0
        %282 = vmatprep.subr.mxu0 0.0
        %283 = vmatpush1.msra.mxu0 0.0
        %284 = vmatprep.subr.mxu0 0.0
        %285 = vmatpush1.msra.mxu0 0.0
        %286 = vmatprep.subr.mxu0 0.0
        %287 = vmatpush1.msra.mxu0 0.0
        %288 = vmatprep.subr.mxu0 0.0
        %289 = vmatpush1.msra.mxu0 0.0
        %290 = vmatprep.mubr.f32.mxu0 0.0
        %291 = vmatmul.mubr.f32.gmra.mrb[0].mxu0 %v224
        %v292 = vpop.f32.mrb[0].mxu0
        %v293 = vadd.f32 0.0, %v292
        %v294 = vpop.f32.mrb[0].mxu0
        %v295 = vadd.f32 0.0, %v294
        %296 = vdwg.mxu0
        %v299 = vcombine.low %v293, %v295
        %301 = vst [vmem:[%s172] sm:$0xff] %v299
        %s302 = sand.u32 %s75, 1
        %s303 = scalar_lea.sflag [#allocation5], %s302
        %s304 = sand.u32 %s75, 1
        %s305 = smul.addr %s304, 8
        %s306 = scalar_lea.vmem [#allocation8], %s305
        // Predicated region
        $region37: #{tpu_custom_call.1} parent=27 // pred_check
          %p307 = pneg %p85
        $region38: #{tpu_custom_call.1} parent=27 // pred_check_branch
          %309 = sbr.rel (%p307) target = $region40
        $region39: #{tpu_custom_call.1} parent=27 // pred_region
          %s311 = ssub.s32 128, 128
          %312 = vsyncadd %s303, %s311
          %s313 = smul.addr %s20, 2
          %s314 = smul.addr %s313, 64
          %s315 = scalar_lea.hbm %s2, %s314
          %s317 = sshll.u32 %s306, 4
          %s318 = int_to_ptr.vmem [resolvable:$true] %s317
          %320 = dma.vmem_to_hbm [thread:$0]  %s318, 128, %s315, %s303
        $region40: #{tpu_custom_call.1} parent=27 // pred_fallthru
          _
      $region28: #{tpu_custom_call.1} parent=5 // pred_fallthru
        _
      %p321 = scmp.le.s32.totalorder 2, %s15
      // Predicated region
      $region41: #{tpu_custom_call.1} parent=5 // pred_check
        %p322 = pneg %p321
      $region42: #{tpu_custom_call.1} parent=5 // pred_check_branch
        %324 = sbr.rel (%p322) target = $region44
      $region43: #{tpu_custom_call.1} parent=5 // pred_region
        %s325 = ssub.s32 %s15, 2
        // Predicated region
        $region45: #{tpu_custom_call.1} parent=43 // pred_check
          %p326 = pneg %p91
        $region46: #{tpu_custom_call.1} parent=43 // pred_check_branch
          %328 = sbr.rel (%p326) target = $region48
        $region47: #{tpu_custom_call.1} parent=43 // pred_region
          %s329 = sand.u32 %s76, 1
          %s330 = scalar_lea.sflag [#allocation5], %s329
          %s331 = sand.u32 %s76, 1
          %s332 = smul.addr %s331, 8
          %s333 = scalar_lea.vmem [#allocation8], %s332
          %334 = dma.done %s330, 128
        $region48: #{tpu_custom_call.1} parent=43 // pred_fallthru
          _
      $region44: #{tpu_custom_call.1} parent=5 // pred_fallthru
        _
    $region6: #{tpu_custom_call.1} parent=1 // loop_footer
      %s19 = sadd.s32 1, %s15
    $region7: #{tpu_custom_call.1} parent=1 // loop_footer_branch
      %14 = sbr.rel target = $region3
    $region8: #{tpu_custom_call.1} parent=1 // loop_exit
      _
    %335 = vsyncpa [#allocation4], 1
    %s336 = scalar_lea.sflag [#allocation4], 1
    %337 = vsyncpa %s336, 1
    %338 = vsyncpa [#allocation7], 1
    %339 = vsyncpa [#allocation5], 1
    %s340 = scalar_lea.sflag [#allocation5], 1
    %341 = vsyncpa %s340, 1

</llo_original>
